<compile_context>
chip_gen: v7x
topology: tpu7x:2x2x1
jax: 0.10.0
libtpu: 0.0.40
codegen_flags: <defaults>
</compile_context>

<pallas_src>
import math

import jax
import jax.numpy as jnp
from jax.experimental import pallas as pl
from jax.experimental.pallas import tpu as pltpu


# ---------------------------------------------------------------------------
# Production path: metadata-only reshape.
# ---------------------------------------------------------------------------

def flatten(x: jax.Array) -> jax.Array:
    """torch's x.view(x.size(0), -1): metadata-only reshape, zero HBM traffic."""
    b = x.shape[0]
    d = math.prod(x.shape[1:]) if x.ndim > 1 else 1
    return x.reshape(b, d)


# ---------------------------------------------------------------------------
# Explicit Pallas copy kernels (only needed when the flatten must materialize
# a fresh HBM buffer, e.g. for benchmarking or as a fusion template).
# ---------------------------------------------------------------------------

def _flatten_copy_kernel(x_ref, o_ref):
    # Straight vreg copy of one lane/sublane-dense tile.
    o_ref[...] = x_ref[...]


def _flatten_dma_kernel(x_hbm, o_hbm, sem):
    # Whole-buffer HBM -> HBM streaming DMA: no grid, no VMEM staging.
    cp = pltpu.make_async_copy(x_hbm, o_hbm, sem)
    cp.start()
    cp.wait()


# Residency = 4 * tile (in + out, double-buffered).
_DEFAULT_SAFE_RESIDENT_BYTES = 14 * 1024 * 1024  # under v5e's 16 MiB default scoped VMEM
_MAX_RESIDENT_BYTES = 24 * 1024 * 1024           # past this, skip VMEM staging entirely


def _tile_budget_bytes() -> int:
    """Per-tile byte budget. 2 MiB is near-roofline on v5e/v6e; v7x (64 MiB
    physical VMEM, ~3.2 TB/s HBM) benefits from 4 MiB tiles to amortize the
    fixed per-grid-step overhead. Best-effort detection; safe either way."""
    base = 2 * 1024 * 1024
    try:
        vmem = int(getattr(pltpu.get_tpu_info(), "vmem_capacity_bytes", 0))
    except Exception:
        vmem = 0
    if 0 < vmem <= 64 * 1024 * 1024:  # v7x-class part
        return 4 * 1024 * 1024
    return base


def _plan_copy(b: int, d: int, itemsize: int, budget_bytes: int):
    """Pick a copy view (R, C) of the flat buffer and a block (TM, TD) with
    TD % 128 == 0 (or TD == C) and TM % sublane_quantum == 0 (or TM == R),
    filling the byte budget. Returns ((R, C), (TM, TD))."""
    sub = max(8, 32 // itemsize)          # native sublane quantum for this dtype
    total = b * d
    max_elems = max(budget_bytes // itemsize, sub * 128)

    # Re-row: if the natural (b, d) view wastes sublanes / is lane-unaligned
    # but the flat element count is (sub*128)-divisible, copy through a dense
    # (R, 128) view instead. Every tile is then one fully contiguous HBM chunk
    # with unmasked stores; the reshape back to (b, d) is metadata-only.
    if (b % sub != 0 or d % 128 != 0) and total % (sub * 128) == 0:
        R, C = total // 128, 128          # R is a multiple of `sub` by construction
    else:
        R, C = b, d

    # Keep >=2 blocks when a single tile would swallow a "large" copy so that
    # v7x's two TensorCores can both stream (harmless on single-TC v5e/v6e).
    if total <= max_elems and total * itemsize >= (1 << 20):
        max_elems = max(sub * 128, (total + 1) // 2)

    # Lane (minor) block dim: multiples of 128 => unmasked vst. Fill whatever
    # budget the minimum sublane extent leaves. Unaligned C must take the full
    # extent (layout rule); the caller guards its VMEM footprint.
    if C % 128 == 0:
        td = min(C, max(128, ((max_elems // min(R, sub)) // 128) * 128))
    else:
        td = C

    # Sublane block dim: fill the rest of the budget in dtype-native quanta.
    rows = max(max_elems // td, 1)
    if R <= rows:
        tm = R
    else:
        tm = min(R, max(sub, (rows // sub) * sub))

    return (R, C), (tm, td)


def flatten_pallas_dma(x: jax.Array) -> jax.Array:
    """flatten() semantics via one whole-buffer HBM->HBM DMA (no VMEM staging)."""
    b = x.shape[0]
    d = math.prod(x.shape[1:]) if x.ndim > 1 else 1
    x2 = x.reshape(b, d)
    itemsize = jnp.dtype(x2.dtype).itemsize
    return pl.pallas_call(
        _flatten_dma_kernel,
        out_shape=jax.ShapeDtypeStruct((b, d), x2.dtype),
        in_specs=[pl.BlockSpec(memory_space=pl.ANY)],
        out_specs=pl.BlockSpec(memory_space=pl.ANY),
        scratch_shapes=[pltpu.SemaphoreType.DMA],
        cost_estimate=pl.CostEstimate(
            flops=0, transcendentals=0, bytes_accessed=2 * b * d * itemsize),
    )(x2)


def flatten_pallas(x: jax.Array) -> jax.Array:
    """Same semantics as flatten(), but the data movement runs in a Pallas
    kernel over large lane/sublane-dense tiles (fusion / benchmark stub)."""
    b = x.shape[0]
    d = math.prod(x.shape[1:]) if x.ndim > 1 else 1
    x2 = x.reshape(b, d)                       # metadata-only glue
    itemsize = jnp.dtype(x2.dtype).itemsize

    budget = _tile_budget_bytes()
    (R, C), (tm, td) = _plan_copy(b, d, itemsize, budget)
    tile_bytes = tm * td * itemsize
    resident = 4 * tile_bytes                  # in + out, double-buffered

    if resident > _MAX_RESIDENT_BYTES:
        # Unaligned-D shape whose forced full-extent tile would exceed any safe
        # scoped-VMEM budget (and possibly v7x's 64 MiB physical VMEM): stream
        # a single whole-buffer DMA instead of VMEM staging.
        return flatten_pallas_dma(x2)

    xv = x2.reshape(R, C)                      # metadata-only re-rowing
    grid = (pl.cdiv(R, tm), pl.cdiv(C, td))

    cp_kwargs = dict(dimension_semantics=("parallel", "parallel"))
    if resident > _DEFAULT_SAFE_RESIDENT_BYTES:
        # Above v5e's 16 MiB default scoped-VMEM budget: raise it explicitly
        # (still far below every generation's physical VMEM).
        cp_kwargs["vmem_limit_bytes"] = 32 * 1024 * 1024

    out = pl.pallas_call(
        _flatten_copy_kernel,
        out_shape=jax.ShapeDtypeStruct((R, C), x2.dtype),
        grid_spec=pltpu.PrefetchScalarGridSpec(
            num_scalar_prefetch=0,
            grid=grid,
            in_specs=[pl.BlockSpec((tm, td), lambda i, j: (i, j))],
            out_specs=pl.BlockSpec((tm, td), lambda i, j: (i, j)),
        ),
        compiler_params=pltpu.CompilerParams(**cp_kwargs),
        cost_estimate=pl.CostEstimate(
            flops=0, transcendentals=0, bytes_accessed=2 * b * d * itemsize),
    )(xv)
    return out.reshape(b, d)                   # metadata-only


if __name__ == "__main__":
    key = jax.random.PRNGKey(0)
    # Small NCHW input consistent with a conv-net feature map.
    B, C, H, W = 2, 4, 16, 16
    x = jax.random.normal(key, (B, C, H, W), dtype=jnp.float32)

    # Zero-cost production path (pure metadata reshape).
    ref = jax.block_until_ready(flatten(x))

    # Pallas tiled-copy path (re-rowed dense tiles).
    y = jax.block_until_ready(flatten_pallas(x))
    assert y.shape == (B, C * H * W), y.shape
    assert y.dtype == x.dtype
    assert bool(jnp.all(y == ref))
    assert bool(jnp.all(ref == x.reshape(B, -1)))

    # Single whole-buffer HBM->HBM DMA path.
    z = jax.block_until_ready(flatten_pallas_dma(x))
    assert z.shape == (B, C * H * W), z.shape
    assert bool(jnp.all(z == ref))

    # Exercise the dtype-aware sublane quantum (bf16 packs 16 rows/tile).
    x_bf16 = jax.random.normal(jax.random.PRNGKey(1), (2, 8, 32, 32),
                               dtype=jnp.bfloat16)
    y_bf16 = jax.block_until_ready(flatten_pallas(x_bf16))
    assert y_bf16.shape == (2, 8 * 32 * 32)
    assert bool(jnp.all(y_bf16 == flatten(x_bf16)))

    print("KERNEL_OK")
</pallas_src>

<mosaic_0001>
module attributes {stable_mosaic.version = 11 : i64} {
  func.func @_flatten_copy_kernel(%arg0: i32, %arg1: i32, %arg2: memref<16x128xf32, #tpu.memory_space<vmem>>, %arg3: memref<16x128xf32, #tpu.memory_space<vmem>>) attributes {dimension_semantics = [#tpu.dimension_semantics<parallel>, #tpu.dimension_semantics<parallel>], iteration_bounds = array<i64: 1, 1>, scalar_prefetch = 0 : i64, scratch_operands = 0 : i64, tpu.core_type = #tpu.core_type<tc>, window_params = [{transform_indices = @transform_0, window_bounds = array<i64: 16, 128>}, {transform_indices = @transform_1, window_bounds = array<i64: 16, 128>}]} {
    %c0 = arith.constant 0 : index
    %c0_0 = arith.constant 0 : index
    %0 = vector.load %arg2[%c0, %c0_0] : memref<16x128xf32, #tpu.memory_space<vmem>>, vector<16x128xf32>
    %c0_1 = arith.constant 0 : index
    %c0_2 = arith.constant 0 : index
    %1 = vector.load %arg3[%c0_1, %c0_2] : memref<16x128xf32, #tpu.memory_space<vmem>>, vector<16x128xf32>
    tpu.vector_store %arg3[%c0_1, %c0_2], %0 {strides = array<i32>} : memref<16x128xf32, #tpu.memory_space<vmem>>, vector<16x128xf32>,
    return
  }
  func.func @transform_0(%arg0: i32, %arg1: i32) -> (i32, i32) {
    %c0_i32 = arith.constant 0 : i32
    return %arg0, %arg1 : i32, i32
  }
  func.func @transform_1(%arg0: i32, %arg1: i32) -> (i32, i32) {
    %c0_i32 = arith.constant 0 : i32
    return %arg0, %arg1 : i32, i32
  }
}

</mosaic_0001>

<llo_original>
// kernel: tpu_custom_call.1
$region0: #{tpu_custom_call.1}
  #allocation0 [shape = 'u32[]', space=smem, size = 0x4, offset = 0x4, fixed_abs, tag = 'smem constant byte address 0x4 - core index']
  #allocation1 [shape = 'u32[144,128]{1,0:T(1,128)}', space=vmem, size = 0x12000, scoped, tag = 'internal scratch']
  %s0 = inlined_call_operand.hbm [shape: f32[16,128], index: 0, kind: input, shape index: {}]
  %s1 = inlined_call_operand.hbm [shape: f32[16,128], index: 1, kind: output, shape index: {}]
  %s2 = sld [smem:[#allocation0]]
  $region18: #{tpu_custom_call.1} parent=0
    _
  %s4 = ssub.s32 1, %s2
  %s5 = scalar_select 0, %s4, %s2
  $region1: #{tpu_custom_call.1} parent=0
    #allocation2 [shape = 'u8[8192]{0}', space=vmem, size = 0x2000, scoped, tag = 'input window, operand 0, single buffered']
    #allocation3 [shape = 's32[1]{0}', space=sflag, size = 0x4, scoped, tag = 'scoped memory for tpu_custom_call.1']
    #allocation4 [shape = 's32[1]{0}', space=sflag, size = 0x4, scoped, tag = 'scoped memory for tpu_custom_call.1']
    #allocation5 [shape = 'u8[8192]{0}', space=vmem, size = 0x2000, scoped, tag = 'output window, operand 0, single buffered']
    %6 = vsyncpa [#allocation3], 0
    %7 = vsyncpa [#allocation4], 0
    // Predicated region
    $region2: #{tpu_custom_call.1} parent=1 // pred_check
      _
    $region3: #{tpu_custom_call.1} parent=1 // pred_check_branch
      %9 = sbr.rel (0) target = $region5
    $region4: #{tpu_custom_call.1} parent=1 // pred_region
      %s11 = ssub.s32 256, 256
      %12 = vsyncadd [#allocation3], %s11
      %s13 = sshll.u32 [#allocation2], 4
      %s14 = int_to_ptr.vmem [resolvable:$true] %s13
      %19 = dma.hbm_to_vmem [thread:$0]  %s0, 256, %s14, [#allocation3], 128, 128, 8
    $region5: #{tpu_custom_call.1} parent=1 // pred_fallthru
      _
    // Predicated region
    $region6: #{tpu_custom_call.1} parent=1 // pred_check
      _
    $region7: #{tpu_custom_call.1} parent=1 // pred_check_branch
      %21 = sbr.rel (0) target = $region9
    $region8: #{tpu_custom_call.1} parent=1 // pred_region
      %22 = dma.done [#allocation3], 256
    $region9: #{tpu_custom_call.1} parent=1 // pred_fallthru
      _
    %v23 = vld [vmem:[#allocation2] sm:$0xff]
    %v24 = vld [vmem:[#allocation2 + $0x8] sm:$0xff]
    %25 = vst [vmem:[#allocation5] sm:$0xff] %v23
    %26 = vst [vmem:[#allocation5 + $0x8] sm:$0xff] %v24
    // Predicated region
    $region10: #{tpu_custom_call.1} parent=1 // pred_check
      _
    $region11: #{tpu_custom_call.1} parent=1 // pred_check_branch
      %28 = sbr.rel (0) target = $region13
    $region12: #{tpu_custom_call.1} parent=1 // pred_region
      %s30 = ssub.s32 256, 256
      %31 = vsyncadd [#allocation4], %s30
      %s32 = sshll.u32 [#allocation5], 4
      %s33 = int_to_ptr.vmem [resolvable:$true] %s32
      %38 = dma.vmem_to_hbm [thread:$0]  %s33, 256, %s1, [#allocation4], 128, 128, 8
    $region13: #{tpu_custom_call.1} parent=1 // pred_fallthru
      _
    // Predicated region
    $region14: #{tpu_custom_call.1} parent=1 // pred_check
      _
    $region15: #{tpu_custom_call.1} parent=1 // pred_check_branch
      %40 = sbr.rel (0) target = $region17
    $region16: #{tpu_custom_call.1} parent=1 // pred_region
      %41 = dma.done [#allocation4], 256
    $region17: #{tpu_custom_call.1} parent=1 // pred_fallthru
      _
    %42 = vsyncpa [#allocation3], 1
    %43 = vsyncpa [#allocation4], 1

</llo_original>
